<compile_context>
chip_gen: v7x
topology: tpu7x:2x2x1
jax: 0.10.0
libtpu: 0.0.40
codegen_flags: <defaults>
</compile_context>

<pallas_src>
import functools

import jax
import jax.numpy as jnp
from jax.experimental import pallas as pl
from jax.experimental.pallas import tpu as pltpu


def _round_up(x, m):
    return ((x + m - 1) // m) * m


def _ffn_layernorm_kernel(x_ref, w1_ref, w2_ref, w3_ref, g_ref, b_ref, mask_ref, o_ref,
                          *, eps, d_real, matmul_dtype, has_pad, exact_recip):
    """One (tm, dm_p) tile of rows; all three weight matrices resident in VMEM."""
    x = x_ref[...]                                        # f32, keeps the residual path exact

    # --- FFN hot path: matmul_dtype operands on the MXU, f32 accumulation ------------------
    h1 = jnp.maximum(
        jnp.dot(x.astype(matmul_dtype), w1_ref[...],
                preferred_element_type=jnp.float32), 0.0).astype(matmul_dtype)
    h2 = jnp.maximum(
        jnp.dot(h1, w2_ref[...],
                preferred_element_type=jnp.float32), 0.0).astype(matmul_dtype)
    y = jnp.dot(h2, w3_ref[...],
                preferred_element_type=jnp.float32) + x   # + residual (f32)

    # --- LayerNorm (torch semantics: unbiased std, divide by (std + eps)) ------------------
    # Padded lanes of y are exactly zero (weights / x / residual are zero-padded), so row
    # sums over the padded width equal the sums over the real d_model columns.
    mean = jnp.sum(y, axis=-1, keepdims=True) * (1.0 / d_real)
    centered = y - mean
    sq = centered * centered
    if has_pad:
        # Grid-invariant 0/1 mask keeps padded lanes out of the variance (one vmul instead
        # of per-step iota + compare + select).
        sq = sq * mask_ref[...]
    var = jnp.sum(sq, axis=-1, keepdims=True) * (1.0 / max(d_real - 1, 1))
    std = jnp.sqrt(var)
    if exact_recip:
        inv = pl.reciprocal(std + eps, approx=False)      # exact path (f32 matmuls)
    else:
        inv = pl.reciprocal(std + eps, approx=True)       # EUP slot, off the VPU
    # gamma/beta are zero on padded lanes -> padded output lanes are 0 (sliced off outside).
    o_ref[...] = (g_ref[...] * centered * inv + b_ref[...]).astype(o_ref.dtype)


def poswise_ffn(x, w1, w2, w3, a_2, b_2, *, eps=1e-6, tm=512,
                matmul_dtype=jnp.bfloat16, vmem_budget_bytes=None):
    """x: (B, S, d_model) f32; w1:(d_model,d_ff), w2:(d_ff,d_ff), w3:(d_ff,d_model).

    Returns (B, S, d_model) with the same semantics as PoswiseFeedForwardNet.forward.
    """
    B, S, d_model = x.shape
    d_ff = w1.shape[1]
    N = B * S
    matmul_dtype = jnp.dtype(matmul_dtype)
    exact_recip = matmul_dtype == jnp.dtype(jnp.float32)

    # ---- hardware-aware sizing --------------------------------------------------------------
    kind = ""
    try:
        kind = jax.devices()[0].device_kind.lower()
    except Exception:
        pass
    try:
        vmem_cap = int(pltpu.get_tpu_info().vmem_capacity_bytes)
    except Exception:
        vmem_cap = (64 << 20) if "v7" in kind else (128 << 20)
    vmem_limit = int(vmem_cap * 0.8)                 # ~20% headroom for Mosaic scratch/sems
    vmem_budget = vmem_limit if vmem_budget_bytes is None else int(vmem_budget_bytes)
    tm_floor = 128 if "v5" in kind else 256          # MXU height: don't starve the array
    two_tc = "v7" in kind                            # v7x: 2 TensorCores share parallel axes

    # Lane-dense padded widths (multiples of 128 on the lane axis).
    dm_p = _round_up(d_model, 128)
    dff_p = _round_up(d_ff, 128)
    has_pad = dm_p != d_model

    w_itemsize = matmul_dtype.itemsize
    w_bytes = (dm_p * dff_p + dff_p * dff_p + dff_p * dm_p) * w_itemsize

    def _vmem_estimate(t):
        io = 2 * 2 * t * dm_p * 4                         # x + out tiles, double-buffered, f32
        temps = 2 * t * dff_p * w_itemsize + 2 * t * dm_p * 4   # h1/h2 + y/centered live temps
        return io + w_bytes + temps                       # weights single-buffered (Buffered(1))

    # Row tile: multiple of 8 (sublane), no larger than the row count, clamped to the VMEM
    # budget but never below the MXU height (shrinking M is the wrong response to pressure).
    tm_eff = min(_round_up(tm, 8), _round_up(N, 8))
    floor_eff = min(tm_floor, _round_up(N, 8), tm_eff)
    while tm_eff > floor_eff and _vmem_estimate(tm_eff) > vmem_budget:
        tm_eff = max(floor_eff, _round_up(tm_eff // 2, 8))

    # v7x: a 1-step parallel grid leaves one TensorCore idle; split into >= 2 steps if we can.
    if two_tc and (_round_up(N, tm_eff) // tm_eff) < 2 and N > 8:
        tm_eff = max(8, _round_up(-(-N // 2), 8))

    N_p = _round_up(N, tm_eff)

    # --- zero-pad everything to lane/sublane-friendly shapes --------------------------------
    x2d = x.reshape(N, d_model).astype(jnp.float32)
    x_p = jnp.pad(x2d, ((0, N_p - N), (0, dm_p - d_model)))
    w1_p = jnp.pad(w1.astype(matmul_dtype), ((0, dm_p - d_model), (0, dff_p - d_ff)))
    w2_p = jnp.pad(w2.astype(matmul_dtype), ((0, dff_p - d_ff), (0, dff_p - d_ff)))
    w3_p = jnp.pad(w3.astype(matmul_dtype), ((0, dff_p - d_ff), (0, dm_p - d_model)))
    g_p = jnp.pad(a_2.reshape(1, d_model).astype(jnp.float32),
                  ((0, 0), (0, dm_p - d_model)))
    b_p = jnp.pad(b_2.reshape(1, d_model).astype(jnp.float32),
                  ((0, 0), (0, dm_p - d_model)))
    mask_p = jnp.pad(jnp.ones((1, d_model), jnp.float32),
                     ((0, 0), (0, dm_p - d_model)))

    kernel = functools.partial(_ffn_layernorm_kernel, eps=eps, d_real=d_model,
                               matmul_dtype=matmul_dtype, has_pad=has_pad,
                               exact_recip=exact_recip)

    def _build_call(single_buffer):
        # Grid-invariant operands: constant index_map; single-buffer them so the second
        # pipeline buffer doesn't double the resident-weight VMEM.
        wkw = {"pipeline_mode": pl.Buffered(1)} if single_buffer else {}
        in_specs = [
            pl.BlockSpec((tm_eff, dm_p), lambda i: (i, 0)),          # x rows tile
            pl.BlockSpec((dm_p, dff_p), lambda i: (0, 0), **wkw),    # W1 (resident)
            pl.BlockSpec((dff_p, dff_p), lambda i: (0, 0), **wkw),   # W2 (resident)
            pl.BlockSpec((dff_p, dm_p), lambda i: (0, 0), **wkw),    # W3 (resident)
            pl.BlockSpec((1, dm_p), lambda i: (0, 0), **wkw),        # LayerNorm gamma
            pl.BlockSpec((1, dm_p), lambda i: (0, 0), **wkw),        # LayerNorm beta
            pl.BlockSpec((1, dm_p), lambda i: (0, 0), **wkw),        # pad mask (0/1)
        ]
        return pl.pallas_call(
            kernel,
            out_shape=jax.ShapeDtypeStruct((N_p, dm_p), x.dtype),
            grid_spec=pltpu.PrefetchScalarGridSpec(
                num_scalar_prefetch=0,
                grid=(N_p // tm_eff,),
                in_specs=in_specs,
                out_specs=pl.BlockSpec((tm_eff, dm_p), lambda i: (i, 0)),
            ),
            compiler_params=pltpu.CompilerParams(
                dimension_semantics=("parallel",),
                vmem_limit_bytes=vmem_limit,
            ),
        )

    try:
        out_p = _build_call(True)(x_p, w1_p, w2_p, w3_p, g_p, b_p, mask_p)
    except Exception:
        # Installed jax rejected Buffered(1): fall back to default double-buffering
        # (correct, just uses more VMEM for the resident weights).
        out_p = _build_call(False)(x_p, w1_p, w2_p, w3_p, g_p, b_p, mask_p)

    return out_p[:N, :d_model].reshape(B, S, d_model)


# ------------------------------- references for testing --------------------------------------
def _reference_f32(x, w1, w2, w3, a_2, b_2, eps=1e-6):
    h = jnp.maximum(x @ w1, 0.0)
    h = jnp.maximum(h @ w2, 0.0)
    y = h @ w3 + x
    mean = jnp.mean(y, axis=-1, keepdims=True)
    c = y - mean
    std = jnp.sqrt(jnp.sum(c * c, axis=-1, keepdims=True) / (y.shape[-1] - 1))
    return a_2 * c / (std + eps) + b_2


def _reference_mixed(x, w1, w2, w3, a_2, b_2, eps=1e-6, mdt=jnp.bfloat16):
    dot = lambda a, b: jnp.dot(a.astype(mdt), b.astype(mdt),
                               preferred_element_type=jnp.float32)
    h = jnp.maximum(dot(x, w1), 0.0)
    h = jnp.maximum(dot(h, w2), 0.0)
    y = dot(h, w3) + x
    mean = jnp.mean(y, axis=-1, keepdims=True)
    c = y - mean
    std = jnp.sqrt(jnp.sum(c * c, axis=-1, keepdims=True) / (y.shape[-1] - 1))
    return a_2 * c / (std + eps) + b_2


if __name__ == "__main__":
    # Small shapes consistent with the module's forward: (batch, seq, d_model).
    batch, seq, d_model, d_ff = 2, 8, 32, 64

    key = jax.random.PRNGKey(0)
    kx, k1, k2, k3 = jax.random.split(key, 4)

    x = jax.random.normal(kx, (batch, seq, d_model), dtype=jnp.float32)

    # Deterministic synthetic weights (nn.Linear has bias=False in the module).
    w1 = jax.random.normal(k1, (d_model, d_ff), dtype=jnp.float32) * (1.0 / d_model ** 0.5)
    w2 = jax.random.normal(k2, (d_ff, d_ff), dtype=jnp.float32) * (1.0 / d_ff ** 0.5)
    w3 = jax.random.normal(k3, (d_ff, d_model), dtype=jnp.float32) * (1.0 / d_ff ** 0.5)

    # LayerNorm params as in __init__: ones / zeros.
    a_2 = jnp.ones((d_model,), dtype=jnp.float32)
    b_2 = jnp.zeros((d_model,), dtype=jnp.float32)

    # Default fast path: bf16 matmul operands, f32 accumulation + f32 LayerNorm.
    out = jax.block_until_ready(poswise_ffn(x, w1, w2, w3, a_2, b_2))
    ref_mixed = _reference_mixed(x, w1, w2, w3, a_2, b_2)
    assert jnp.allclose(out, ref_mixed, atol=1e-2, rtol=1e-2), \
        "mismatch vs mixed-precision JAX reference"

    # Pure-f32 path matches the exact PyTorch module semantics (exact reciprocal).
    out_f32 = jax.block_until_ready(
        poswise_ffn(x, w1, w2, w3, a_2, b_2, matmul_dtype=jnp.float32))
    ref_f32 = _reference_f32(x, w1, w2, w3, a_2, b_2)
    assert jnp.allclose(out_f32, ref_f32, atol=1e-3, rtol=1e-3), \
        "mismatch vs f32 JAX reference"

    print("KERNEL_OK")
</pallas_src>

<mosaic_0001>
module attributes {stable_mosaic.version = 11 : i64} {
  func.func @_ffn_layernorm_kernel(%arg0: i32, %arg1: memref<16x128xf32, #tpu.memory_space<vmem>>, %arg2: memref<128x128xbf16, #tpu.memory_space<vmem>>, %arg3: memref<128x128xbf16, #tpu.memory_space<vmem>>, %arg4: memref<128x128xbf16, #tpu.memory_space<vmem>>, %arg5: memref<1x128xf32, #tpu.memory_space<vmem>>, %arg6: memref<1x128xf32, #tpu.memory_space<vmem>>, %arg7: memref<1x128xf32, #tpu.memory_space<vmem>>, %arg8: memref<16x128xf32, #tpu.memory_space<vmem>>) attributes {dimension_semantics = [#tpu.dimension_semantics<parallel>], iteration_bounds = array<i64: 1>, scalar_prefetch = 0 : i64, scratch_operands = 0 : i64, tpu.core_type = #tpu.core_type<tc>, window_params = [{transform_indices = @transform_0, window_bounds = array<i64: 16, 128>}, {pipeline_mode = #tpu.pipeline_mode<synchronous>, transform_indices = @transform_1, window_bounds = array<i64: 128, 128>}, {pipeline_mode = #tpu.pipeline_mode<synchronous>, transform_indices = @transform_2, window_bounds = array<i64: 128, 128>}, {pipeline_mode = #tpu.pipeline_mode<synchronous>, transform_indices = @transform_3, window_bounds = array<i64: 128, 128>}, {pipeline_mode = #tpu.pipeline_mode<synchronous>, transform_indices = @transform_4, window_bounds = array<i64: 1, 128>}, {pipeline_mode = #tpu.pipeline_mode<synchronous>, transform_indices = @transform_5, window_bounds = array<i64: 1, 128>}, {pipeline_mode = #tpu.pipeline_mode<synchronous>, transform_indices = @transform_6, window_bounds = array<i64: 1, 128>}, {transform_indices = @transform_7, window_bounds = array<i64: 16, 128>}]} {
    %c0 = arith.constant 0 : index
    %c0_0 = arith.constant 0 : index
    %0 = vector.load %arg1[%c0, %c0_0] : memref<16x128xf32, #tpu.memory_space<vmem>>, vector<16x128xf32>
    %1 = arith.truncf %0 : vector<16x128xf32> to vector<16x128xbf16>
    %c0_1 = arith.constant 0 : index
    %c0_2 = arith.constant 0 : index
    %2 = vector.load %arg2[%c0_1, %c0_2] : memref<128x128xbf16, #tpu.memory_space<vmem>>, vector<128x128xbf16>
    %cst = arith.constant dense<0.000000e+00> : vector<16x128xf32>
    %3 = tpu.matmul %1, %2, %cst {dimension_numbers = #tpu.dot_dimension_numbers<[1], [0], [0], [1], [0, 0, 1, 1], [], []>} : vector<16x128xbf16>, vector<128x128xbf16>, vector<16x128xf32> -> vector<16x128xf32>
    %cst_3 = arith.constant 0.000000e+00 : f32
    %4 = vector.broadcast %cst_3 : f32 to vector<16x128xf32>
    %5 = arith.maximumf %3, %4 : vector<16x128xf32>
    %6 = arith.truncf %5 : vector<16x128xf32> to vector<16x128xbf16>
    %c0_4 = arith.constant 0 : index
    %c0_5 = arith.constant 0 : index
    %7 = vector.load %arg3[%c0_4, %c0_5] : memref<128x128xbf16, #tpu.memory_space<vmem>>, vector<128x128xbf16>
    %cst_6 = arith.constant dense<0.000000e+00> : vector<16x128xf32>
    %8 = tpu.matmul %6, %7, %cst_6 {dimension_numbers = #tpu.dot_dimension_numbers<[1], [0], [0], [1], [0, 0, 1, 1], [], []>} : vector<16x128xbf16>, vector<128x128xbf16>, vector<16x128xf32> -> vector<16x128xf32>
    %cst_7 = arith.constant 0.000000e+00 : f32
    %9 = vector.broadcast %cst_7 : f32 to vector<16x128xf32>
    %10 = arith.maximumf %8, %9 : vector<16x128xf32>
    %11 = arith.truncf %10 : vector<16x128xf32> to vector<16x128xbf16>
    %c0_8 = arith.constant 0 : index
    %c0_9 = arith.constant 0 : index
    %12 = vector.load %arg4[%c0_8, %c0_9] : memref<128x128xbf16, #tpu.memory_space<vmem>>, vector<128x128xbf16>
    %cst_10 = arith.constant dense<0.000000e+00> : vector<16x128xf32>
    %13 = tpu.matmul %11, %12, %cst_10 {dimension_numbers = #tpu.dot_dimension_numbers<[1], [0], [0], [1], [0, 0, 1, 1], [], []>} : vector<16x128xbf16>, vector<128x128xbf16>, vector<16x128xf32> -> vector<16x128xf32>
    %14 = arith.addf %13, %0 : vector<16x128xf32>
    %cst_11 = arith.constant dense<0.000000e+00> : vector<16xf32>
    %15 = vector.multi_reduction <add>, %14, %cst_11 [1] : vector<16x128xf32> to vector<16xf32>
    %16 = vector.shape_cast %15 : vector<16xf32> to vector<16x1xf32>
    %cst_12 = arith.constant 3.125000e-02 : f32
    %17 = vector.broadcast %cst_12 : f32 to vector<16x1xf32>
    %18 = arith.mulf %16, %17 : vector<16x1xf32>
    %19 = vector.broadcast %18 : vector<16x1xf32> to vector<16x128xf32>
    %20 = arith.subf %14, %19 : vector<16x128xf32>
    %21 = arith.mulf %20, %20 : vector<16x128xf32>
    %c0_13 = arith.constant 0 : index
    %c0_14 = arith.constant 0 : index
    %22 = vector.load %arg7[%c0_13, %c0_14] : memref<1x128xf32, #tpu.memory_space<vmem>>, vector<1x128xf32>
    %23 = vector.broadcast %22 : vector<1x128xf32> to vector<16x128xf32>
    %24 = arith.mulf %21, %23 : vector<16x128xf32>
    %cst_15 = arith.constant dense<0.000000e+00> : vector<16xf32>
    %25 = vector.multi_reduction <add>, %24, %cst_15 [1] : vector<16x128xf32> to vector<16xf32>
    %26 = vector.shape_cast %25 : vector<16xf32> to vector<16x1xf32>
    %cst_16 = arith.constant 0.0322580636 : f32
    %27 = vector.broadcast %cst_16 : f32 to vector<16x1xf32>
    %28 = arith.mulf %26, %27 : vector<16x1xf32>
    %29 = math.sqrt %28 : vector<16x1xf32>
    %cst_17 = arith.constant 9.99999997E-7 : f32
    %30 = vector.broadcast %cst_17 : f32 to vector<16x1xf32>
    %31 = arith.addf %29, %30 : vector<16x1xf32>
    %32 = tpu.reciprocal %31 {approx = true} : vector<16x1xf32> -> vector<16x1xf32>
    %c0_18 = arith.constant 0 : index
    %c0_19 = arith.constant 0 : index
    %33 = vector.load %arg5[%c0_18, %c0_19] : memref<1x128xf32, #tpu.memory_space<vmem>>, vector<1x128xf32>
    %34 = vector.broadcast %33 : vector<1x128xf32> to vector<16x128xf32>
    %35 = arith.mulf %34, %20 : vector<16x128xf32>
    %36 = vector.broadcast %32 : vector<16x1xf32> to vector<16x128xf32>
    %37 = arith.mulf %35, %36 : vector<16x128xf32>
    %c0_20 = arith.constant 0 : index
    %c0_21 = arith.constant 0 : index
    %38 = vector.load %arg6[%c0_20, %c0_21] : memref<1x128xf32, #tpu.memory_space<vmem>>, vector<1x128xf32>
    %39 = vector.broadcast %38 : vector<1x128xf32> to vector<16x128xf32>
    %40 = arith.addf %37, %39 : vector<16x128xf32>
    %c0_22 = arith.constant 0 : index
    %c0_23 = arith.constant 0 : index
    %41 = vector.load %arg8[%c0_22, %c0_23] : memref<16x128xf32, #tpu.memory_space<vmem>>, vector<16x128xf32>
    tpu.vector_store %arg8[%c0_22, %c0_23], %40 {strides = array<i32>} : memref<16x128xf32, #tpu.memory_space<vmem>>, vector<16x128xf32>,
    return
  }
  func.func @transform_0(%arg0: i32) -> (i32, i32) {
    %c0_i32 = arith.constant 0 : i32
    %c0_i32_0 = arith.constant 0 : i32
    return %arg0, %c0_i32 : i32, i32
  }
  func.func @transform_1(%arg0: i32) -> (i32, i32) {
    %c0_i32 = arith.constant 0 : i32
    %c0_i32_0 = arith.constant 0 : i32
    %c0_i32_1 = arith.constant 0 : i32
    return %c0_i32, %c0_i32_0 : i32, i32
  }
  func.func @transform_2(%arg0: i32) -> (i32, i32) {
    %c0_i32 = arith.constant 0 : i32
    %c0_i32_0 = arith.constant 0 : i32
    %c0_i32_1 = arith.constant 0 : i32
    return %c0_i32, %c0_i32_0 : i32, i32
  }
  func.func @transform_3(%arg0: i32) -> (i32, i32) {
    %c0_i32 = arith.constant 0 : i32
    %c0_i32_0 = arith.constant 0 : i32
    %c0_i32_1 = arith.constant 0 : i32
    return %c0_i32, %c0_i32_0 : i32, i32
  }
  func.func @transform_4(%arg0: i32) -> (i32, i32) {
    %c0_i32 = arith.constant 0 : i32
    %c0_i32_0 = arith.constant 0 : i32
    %c0_i32_1 = arith.constant 0 : i32
    return %c0_i32, %c0_i32_0 : i32, i32
  }
  func.func @transform_5(%arg0: i32) -> (i32, i32) {
    %c0_i32 = arith.constant 0 : i32
    %c0_i32_0 = arith.constant 0 : i32
    %c0_i32_1 = arith.constant 0 : i32
    return %c0_i32, %c0_i32_0 : i32, i32
  }
  func.func @transform_6(%arg0: i32) -> (i32, i32) {
    %c0_i32 = arith.constant 0 : i32
    %c0_i32_0 = arith.constant 0 : i32
    %c0_i32_1 = arith.constant 0 : i32
    return %c0_i32, %c0_i32_0 : i32, i32
  }
  func.func @transform_7(%arg0: i32) -> (i32, i32) {
    %c0_i32 = arith.constant 0 : i32
    %c0_i32_0 = arith.constant 0 : i32
    return %arg0, %c0_i32 : i32, i32
  }
}

module attributes {stable_mosaic.version = 11 : i64} {
  func.func @_ffn_layernorm_kernel(%arg0: i32, %arg1: memref<16x128xf32, #tpu.memory_space<vmem>>, %arg2: memref<128x128xbf16, #tpu.memory_space<vmem>>, %arg3: memref<128x128xbf16, #tpu.memory_space<vmem>>, %arg4: memref<128x128xbf16, #tpu.memory_space<vmem>>, %arg5: memref<1x128xf32, #tpu.memory_space<vmem>>, %arg6: memref<1x128xf32, #tpu.memory_space<vmem>>, %arg7: memref<1x128xf32, #tpu.memory_space<vmem>>, %arg8: memref<16x128xf32, #tpu.memory_space<vmem>>) attributes {dimension_semantics = [#tpu.dimension_semantics<parallel>], iteration_bounds = array<i64: 1>, scalar_prefetch = 0 : i64, scratch_operands = 0 : i64, tpu.core_type = #tpu.core_type<tc>, window_params = [{transform_indices = @transform_0, window_bounds = array<i64: 16, 128>}, {pipeline_mode = #tpu.pipeline_mode<synchronous>, transform_indices = @transform_1, window_bounds = array<i64: 128, 128>}, {pipeline_mode = #tpu.pipeline_mode<synchronous>, transform_indices = @transform_2, window_bounds = array<i64: 128, 128>}, {pipeline_mode = #tpu.pipeline_mode<synchronous>, transform_indices = @transform_3, window_bounds = array<i64: 128, 128>}, {pipeline_mode = #tpu.pipeline_mode<synchronous>, transform_indices = @transform_4, window_bounds = array<i64: 1, 128>}, {pipeline_mode = #tpu.pipeline_mode<synchronous>, transform_indices = @transform_5, window_bounds = array<i64: 1, 128>}, {pipeline_mode = #tpu.pipeline_mode<synchronous>, transform_indices = @transform_6, window_bounds = array<i64: 1, 128>}, {transform_indices = @transform_7, window_bounds = array<i64: 16, 128>}]} {
    %c0 = arith.constant 0 : index
    %c0_0 = arith.constant 0 : index
    %0 = vector.load %arg1[%c0, %c0_0] : memref<16x128xf32, #tpu.memory_space<vmem>>, vector<16x128xf32>
    %1 = arith.truncf %0 : vector<16x128xf32> to vector<16x128xbf16>
    %c0_1 = arith.constant 0 : index
    %c0_2 = arith.constant 0 : index
    %2 = vector.load %arg2[%c0_1, %c0_2] : memref<128x128xbf16, #tpu.memory_space<vmem>>, vector<128x128xbf16>
    %cst = arith.constant dense<0.000000e+00> : vector<16x128xf32>
    %3 = tpu.matmul %1, %2, %cst {dimension_numbers = #tpu.dot_dimension_numbers<[1], [0], [0], [1], [0, 0, 1, 1], [], []>} : vector<16x128xbf16>, vector<128x128xbf16>, vector<16x128xf32> -> vector<16x128xf32>
    %cst_3 = arith.constant 0.000000e+00 : f32
    %4 = vector.broadcast %cst_3 : f32 to vector<16x128xf32>
    %5 = arith.maximumf %3, %4 : vector<16x128xf32>
    %6 = arith.truncf %5 : vector<16x128xf32> to vector<16x128xbf16>
    %c0_4 = arith.constant 0 : index
    %c0_5 = arith.constant 0 : index
    %7 = vector.load %arg3[%c0_4, %c0_5] : memref<128x128xbf16, #tpu.memory_space<vmem>>, vector<128x128xbf16>
    %cst_6 = arith.constant dense<0.000000e+00> : vector<16x128xf32>
    %8 = tpu.matmul %6, %7, %cst_6 {dimension_numbers = #tpu.dot_dimension_numbers<[1], [0], [0], [1], [0, 0, 1, 1], [], []>} : vector<16x128xbf16>, vector<128x128xbf16>, vector<16x128xf32> -> vector<16x128xf32>
    %cst_7 = arith.constant 0.000000e+00 : f32
    %9 = vector.broadcast %cst_7 : f32 to vector<16x128xf32>
    %10 = arith.maximumf %8, %9 : vector<16x128xf32>
    %11 = arith.truncf %10 : vector<16x128xf32> to vector<16x128xbf16>
    %c0_8 = arith.constant 0 : index
    %c0_9 = arith.constant 0 : index
    %12 = vector.load %arg4[%c0_8, %c0_9] : memref<128x128xbf16, #tpu.memory_space<vmem>>, vector<128x128xbf16>
    %cst_10 = arith.constant dense<0.000000e+00> : vector<16x128xf32>
    %13 = tpu.matmul %11, %12, %cst_10 {dimension_numbers = #tpu.dot_dimension_numbers<[1], [0], [0], [1], [0, 0, 1, 1], [], []>} : vector<16x128xbf16>, vector<128x128xbf16>, vector<16x128xf32> -> vector<16x128xf32>
    %14 = arith.addf %13, %0 : vector<16x128xf32>
    %cst_11 = arith.constant dense<0.000000e+00> : vector<16xf32>
    %15 = vector.multi_reduction <add>, %14, %cst_11 [1] : vector<16x128xf32> to vector<16xf32>
    %16 = vector.shape_cast %15 : vector<16xf32> to vector<16x1xf32>
    %cst_12 = arith.constant 3.125000e-02 : f32
    %17 = vector.broadcast %cst_12 : f32 to vector<16x1xf32>
    %18 = arith.mulf %16, %17 : vector<16x1xf32>
    %19 = vector.broadcast %18 : vector<16x1xf32> to vector<16x128xf32>
    %20 = arith.subf %14, %19 : vector<16x128xf32>
    %21 = arith.mulf %20, %20 : vector<16x128xf32>
    %c0_13 = arith.constant 0 : index
    %c0_14 = arith.constant 0 : index
    %22 = vector.load %arg7[%c0_13, %c0_14] : memref<1x128xf32, #tpu.memory_space<vmem>>, vector<1x128xf32>
    %23 = vector.broadcast %22 : vector<1x128xf32> to vector<16x128xf32>
    %24 = arith.mulf %21, %23 : vector<16x128xf32>
    %cst_15 = arith.constant dense<0.000000e+00> : vector<16xf32>
    %25 = vector.multi_reduction <add>, %24, %cst_15 [1] : vector<16x128xf32> to vector<16xf32>
    %26 = vector.shape_cast %25 : vector<16xf32> to vector<16x1xf32>
    %cst_16 = arith.constant 0.0322580636 : f32
    %27 = vector.broadcast %cst_16 : f32 to vector<16x1xf32>
    %28 = arith.mulf %26, %27 : vector<16x1xf32>
    %29 = math.sqrt %28 : vector<16x1xf32>
    %cst_17 = arith.constant 9.99999997E-7 : f32
    %30 = vector.broadcast %cst_17 : f32 to vector<16x1xf32>
    %31 = arith.addf %29, %30 : vector<16x1xf32>
    %32 = tpu.reciprocal %31 {approx = true} : vector<16x1xf32> -> vector<16x1xf32>
    %c0_18 = arith.constant 0 : index
    %c0_19 = arith.constant 0 : index
    %33 = vector.load %arg5[%c0_18, %c0_19] : memref<1x128xf32, #tpu.memory_space<vmem>>, vector<1x128xf32>
    %34 = vector.broadcast %33 : vector<1x128xf32> to vector<16x128xf32>
    %35 = arith.mulf %34, %20 : vector<16x128xf32>
    %36 = vector.broadcast %32 : vector<16x1xf32> to vector<16x128xf32>
    %37 = arith.mulf %35, %36 : vector<16x128xf32>
    %c0_20 = arith.constant 0 : index
    %c0_21 = arith.constant 0 : index
    %38 = vector.load %arg6[%c0_20, %c0_21] : memref<1x128xf32, #tpu.memory_space<vmem>>, vector<1x128xf32>
    %39 = vector.broadcast %38 : vector<1x128xf32> to vector<16x128xf32>
    %40 = arith.addf %37, %39 : vector<16x128xf32>
    %c0_22 = arith.constant 0 : index
    %c0_23 = arith.constant 0 : index
    %41 = vector.load %arg8[%c0_22, %c0_23] : memref<16x128xf32, #tpu.memory_space<vmem>>, vector<16x128xf32>
    tpu.vector_store %arg8[%c0_22, %c0_23], %40 {strides = array<i32>} : memref<16x128xf32, #tpu.memory_space<vmem>>, vector<16x128xf32>,
    return
  }
  func.func @transform_0(%arg0: i32) -> (i32, i32) {
    %c0_i32 = arith.constant 0 : i32
    %c0_i32_0 = arith.constant 0 : i32
    return %arg0, %c0_i32 : i32, i32
  }
  func.func @transform_1(%arg0: i32) -> (i32, i32) {
    %c0_i32 = arith.constant 0 : i32
    %c0_i32_0 = arith.constant 0 : i32
    %c0_i32_1 = arith.constant 0 : i32
    return %c0_i32, %c0_i32_0 : i32, i32
  }
  func.func @transform_2(%arg0: i32) -> (i32, i32) {
    %c0_i32 = arith.constant 0 : i32
    %c0_i32_0 = arith.constant 0 : i32
    %c0_i32_1 = arith.constant 0 : i32
    return %c0_i32, %c0_i32_0 : i32, i32
  }
  func.func @transform_3(%arg0: i32) -> (i32, i32) {
    %c0_i32 = arith.constant 0 : i32
    %c0_i32_0 = arith.constant 0 : i32
    %c0_i32_1 = arith.constant 0 : i32
    return %c0_i32, %c0_i32_0 : i32, i32
  }
  func.func @transform_4(%arg0: i32) -> (i32, i32) {
    %c0_i32 = arith.constant 0 : i32
    %c0_i32_0 = arith.constant 0 : i32
    %c0_i32_1 = arith.constant 0 : i32
    return %c0_i32, %c0_i32_0 : i32, i32
  }
  func.func @transform_5(%arg0: i32) -> (i32, i32) {
    %c0_i32 = arith.constant 0 : i32
    %c0_i32_0 = arith.constant 0 : i32
    %c0_i32_1 = arith.constant 0 : i32
    return %c0_i32, %c0_i32_0 : i32, i32
  }
  func.func @transform_6(%arg0: i32) -> (i32, i32) {
    %c0_i32 = arith.constant 0 : i32
    %c0_i32_0 = arith.constant 0 : i32
    %c0_i32_1 = arith.constant 0 : i32
    return %c0_i32, %c0_i32_0 : i32, i32
  }
  func.func @transform_7(%arg0: i32) -> (i32, i32) {
    %c0_i32 = arith.constant 0 : i32
    %c0_i32_0 = arith.constant 0 : i32
    return %arg0, %c0_i32 : i32, i32
  }
}

</mosaic_0001>

<llo_original>
// kernel: tpu_custom_call.1
$region0: #{tpu_custom_call.1}
  #allocation0 [shape = 'u32[]', space=smem, size = 0x4, offset = 0x4, fixed_abs, tag = 'smem constant byte address 0x4 - core index']
  #allocation1 [shape = 'u32[144,128]{1,0:T(1,128)}', space=vmem, size = 0x12000, scoped, tag = 'internal scratch']
  %s0 = inlined_call_operand.hbm [shape: f32[16,128], index: 0, kind: input, shape index: {}]
  %s1 = inlined_call_operand.hbm [shape: bf16[128,128], index: 1, kind: input, shape index: {}]
  %s2 = inlined_call_operand.hbm [shape: bf16[128,128], index: 2, kind: input, shape index: {}]
  %s3 = inlined_call_operand.hbm [shape: bf16[128,128], index: 3, kind: input, shape index: {}]
  %s4 = inlined_call_operand.hbm [shape: f32[1,128], index: 4, kind: input, shape index: {}]
  %s5 = inlined_call_operand.hbm [shape: f32[1,128], index: 5, kind: input, shape index: {}]
  %s6 = inlined_call_operand.hbm [shape: f32[1,128], index: 6, kind: input, shape index: {}]
  %s7 = inlined_call_operand.hbm [shape: f32[16,128], index: 7, kind: output, shape index: {}]
  %s8 = sld [smem:[#allocation0]]
  $region66: #{tpu_custom_call.1} parent=0
    _
  %s10 = ssub.s32 1, %s8
  %s11 = scalar_select 0, %s10, %s8
  $region1: #{tpu_custom_call.1} parent=0
    #allocation2 [shape = 'u8[8192]{0}', space=vmem, size = 0x2000, scoped, tag = 'input window, operand 0, single buffered']
    #allocation3 [shape = 's32[1]{0}', space=sflag, size = 0x4, scoped, tag = 'scoped memory for tpu_custom_call.1']
    #allocation4 [shape = 's32[1]{0}', space=sflag, size = 0x4, scoped, tag = 'scoped memory for tpu_custom_call.1']
    #allocation5 [shape = 'u8[32768]{0}', space=vmem, size = 0x8000, scoped, tag = 'input window, operand 1, single buffered']
    #allocation6 [shape = 's32[1]{0}', space=sflag, size = 0x4, scoped, tag = 'scoped memory for tpu_custom_call.1']
    #allocation7 [shape = 'u8[32768]{0}', space=vmem, size = 0x8000, scoped, tag = 'input window, operand 2, single buffered']
    #allocation8 [shape = 'u8[32768]{0}', space=vmem, size = 0x8000, scoped, tag = 'input window, operand 3, single buffered']
    #allocation9 [shape = 's32[1]{0}', space=sflag, size = 0x4, scoped, tag = 'scoped memory for tpu_custom_call.1']
    #allocation10 [shape = 'u8[512]{0}', space=vmem, size = 0x400, scoped, tag = 'input window, operand 4, single buffered']
    #allocation11 [shape = 'u8[512]{0}', space=vmem, size = 0x400, scoped, tag = 'input window, operand 5, single buffered']
    #allocation12 [shape = 's32[1]{0}', space=sflag, size = 0x4, scoped, tag = 'scoped memory for tpu_custom_call.1']
    #allocation13 [shape = 'u8[512]{0}', space=vmem, size = 0x400, scoped, tag = 'input window, operand 6, single buffered']
    #allocation14 [shape = 'u8[8192]{0}', space=vmem, size = 0x2000, scoped, tag = 'output window, operand 0, single buffered']
    %12 = vsyncpa [#allocation3], 0
    %13 = vsyncpa [#allocation6], 0
    %14 = vsyncpa [#allocation9], 0
    %15 = vsyncpa [#allocation12], 0
    %16 = vsyncpa [#allocation4], 0
    // Predicated region
    $region2: #{tpu_custom_call.1} parent=1 // pred_check
      _
    $region3: #{tpu_custom_call.1} parent=1 // pred_check_branch
      %18 = sbr.rel (0) target = $region5
    $region4: #{tpu_custom_call.1} parent=1 // pred_region
      %s20 = ssub.s32 256, 256
      %21 = vsyncadd [#allocation3], %s20
      %s22 = sshll.u32 [#allocation2], 4
      %s23 = int_to_ptr.vmem [resolvable:$true] %s22
      %28 = dma.hbm_to_vmem [thread:$0]  %s0, 256, %s23, [#allocation3], 128, 128, 8
    $region5: #{tpu_custom_call.1} parent=1 // pred_fallthru
      _
    // Predicated region
    $region6: #{tpu_custom_call.1} parent=1 // pred_check
      _
    $region7: #{tpu_custom_call.1} parent=1 // pred_check_branch
      %30 = sbr.rel (0) target = $region9
    $region8: #{tpu_custom_call.1} parent=1 // pred_region
      %s32 = ssub.s32 1024, 1024
      %33 = vsyncadd [#allocation6], %s32
      %s34 = sshll.u32 [#allocation5], 4
      %s35 = int_to_ptr.vmem [resolvable:$true] %s34
      %40 = dma.hbm_to_vmem [thread:$0]  %s1, 1024, %s35, [#allocation6], 64, 64, 4
    $region9: #{tpu_custom_call.1} parent=1 // pred_fallthru
      _
    // Predicated region
    $region10: #{tpu_custom_call.1} parent=1 // pred_check
      _
    $region11: #{tpu_custom_call.1} parent=1 // pred_check_branch
      %42 = sbr.rel (0) target = $region13
    $region12: #{tpu_custom_call.1} parent=1 // pred_region
      %s44 = ssub.s32 1024, 1024
      %45 = vsyncadd [#allocation6], %s44
      %s46 = sshll.u32 [#allocation7], 4
      %s47 = int_to_ptr.vmem [resolvable:$true] %s46
      %52 = dma.hbm_to_vmem [thread:$0]  %s2, 1024, %s47, [#allocation6], 64, 64, 4
    $region13: #{tpu_custom_call.1} parent=1 // pred_fallthru
      _
    // Predicated region
    $region14: #{tpu_custom_call.1} parent=1 // pred_check
      _
    $region15: #{tpu_custom_call.1} parent=1 // pred_check_branch
      %54 = sbr.rel (0) target = $region17
    $region16: #{tpu_custom_call.1} parent=1 // pred_region
      %s56 = ssub.s32 1024, 1024
      %57 = vsyncadd [#allocation9], %s56
      %s58 = sshll.u32 [#allocation8], 4
      %s59 = int_to_ptr.vmem [resolvable:$true] %s58
      %64 = dma.hbm_to_vmem [thread:$0]  %s3, 1024, %s59, [#allocation9], 64, 64, 4
    $region17: #{tpu_custom_call.1} parent=1 // pred_fallthru
      _
    // Predicated region
    $region18: #{tpu_custom_call.1} parent=1 // pred_check
      _
    $region19: #{tpu_custom_call.1} parent=1 // pred_check_branch
      %66 = sbr.rel (0) target = $region21
    $region20: #{tpu_custom_call.1} parent=1 // pred_region
      %s68 = ssub.s32 16, 16
      %69 = vsyncadd [#allocation9], %s68
      %s71 = sshll.u32 [#allocation10], 4
      %s72 = int_to_ptr.vmem [resolvable:$true] %s71
      %74 = dma.hbm_to_vmem [thread:$0]  %s4, 16, %s72, [#allocation9]
    $region21: #{tpu_custom_call.1} parent=1 // pred_fallthru
      _
    // Predicated region
    $region22: #{tpu_custom_call.1} parent=1 // pred_check
      _
    $region23: #{tpu_custom_call.1} parent=1 // pred_check_branch
      %76 = sbr.rel (0) target = $region25
    $region24: #{tpu_custom_call.1} parent=1 // pred_region
      %s78 = ssub.s32 16, 16
      %79 = vsyncadd [#allocation12], %s78
      %s81 = sshll.u32 [#allocation11], 4
      %s82 = int_to_ptr.vmem [resolvable:$true] %s81
      %84 = dma.hbm_to_vmem [thread:$0]  %s5, 16, %s82, [#allocation12]
    $region25: #{tpu_custom_call.1} parent=1 // pred_fallthru
      _
    // Predicated region
    $region26: #{tpu_custom_call.1} parent=1 // pred_check
      _
    $region27: #{tpu_custom_call.1} parent=1 // pred_check_branch
      %86 = sbr.rel (0) target = $region29
    $region28: #{tpu_custom_call.1} parent=1 // pred_region
      %s88 = ssub.s32 16, 16
      %89 = vsyncadd [#allocation12], %s88
      %s91 = sshll.u32 [#allocation13], 4
      %s92 = int_to_ptr.vmem [resolvable:$true] %s91
      %94 = dma.hbm_to_vmem [thread:$0]  %s6, 16, %s92, [#allocation12]
    $region29: #{tpu_custom_call.1} parent=1 // pred_fallthru
      _
    // Predicated region
    $region30: #{tpu_custom_call.1} parent=1 // pred_check
      _
    $region31: #{tpu_custom_call.1} parent=1 // pred_check_branch
      %96 = sbr.rel (0) target = $region33
    $region32: #{tpu_custom_call.1} parent=1 // pred_region
      %97 = dma.done [#allocation3], 256
    $region33: #{tpu_custom_call.1} parent=1 // pred_fallthru
      _
    // Predicated region
    $region34: #{tpu_custom_call.1} parent=1 // pred_check
      _
    $region35: #{tpu_custom_call.1} parent=1 // pred_check_branch
      %99 = sbr.rel (0) target = $region37
    $region36: #{tpu_custom_call.1} parent=1 // pred_region
      %100 = dma.done [#allocation6], 1024
    $region37: #{tpu_custom_call.1} parent=1 // pred_fallthru
      _
    // Predicated region
    $region38: #{tpu_custom_call.1} parent=1 // pred_check
      _
    $region39: #{tpu_custom_call.1} parent=1 // pred_check_branch
      %102 = sbr.rel (0) target = $region41
    $region40: #{tpu_custom_call.1} parent=1 // pred_region
      %103 = dma.done [#allocation6], 1024
    $region41: #{tpu_custom_call.1} parent=1 // pred_fallthru
      _
    // Predicated region
    $region42: #{tpu_custom_call.1} parent=1 // pred_check
      _
    $region43: #{tpu_custom_call.1} parent=1 // pred_check_branch
      %105 = sbr.rel (0) target = $region45
    $region44: #{tpu_custom_call.1} parent=1 // pred_region
      %106 = dma.done [#allocation9], 1024
    $region45: #{tpu_custom_call.1} parent=1 // pred_fallthru
      _
    // Predicated region
    $region46: #{tpu_custom_call.1} parent=1 // pred_check
      _
    $region47: #{tpu_custom_call.1} parent=1 // pred_check_branch
      %108 = sbr.rel (0) target = $region49
    $region48: #{tpu_custom_call.1} parent=1 // pred_region
      %109 = dma.done [#allocation9], 16
    $region49: #{tpu_custom_call.1} parent=1 // pred_fallthru
      _
    // Predicated region
    $region50: #{tpu_custom_call.1} parent=1 // pred_check
      _
    $region51: #{tpu_custom_call.1} parent=1 // pred_check_branch
      %111 = sbr.rel (0) target = $region53
    $region52: #{tpu_custom_call.1} parent=1 // pred_region
      %112 = dma.done [#allocation12], 16
    $region53: #{tpu_custom_call.1} parent=1 // pred_fallthru
      _
    // Predicated region
    $region54: #{tpu_custom_call.1} parent=1 // pred_check
      _
    $region55: #{tpu_custom_call.1} parent=1 // pred_check_branch
      %114 = sbr.rel (0) target = $region57
    $region56: #{tpu_custom_call.1} parent=1 // pred_region
      %115 = dma.done [#allocation12], 16
    $region57: #{tpu_custom_call.1} parent=1 // pred_fallthru
      _
    %v117 = vld [vmem:[#allocation2] sm:$0xff]
    %v118 = vld [vmem:[#allocation2 + $0x8] sm:$0xff]
    %v119 = vpack.c.bf16 %v118, %v117
    %v120 = vld [vmem:[#allocation5] sm:$0xf]
    %v121 = vld [vmem:[#allocation5 + $0x4] sm:$0xf]
    %v122 = vld [vmem:[#allocation5 + $0x8] sm:$0xf]
    %v123 = vld [vmem:[#allocation5 + $0xc] sm:$0xf]
    %v124 = vld [vmem:[#allocation5 + $0x10] sm:$0xf]
    %v125 = vld [vmem:[#allocation5 + $0x14] sm:$0xf]
    %v126 = vld [vmem:[#allocation5 + $0x18] sm:$0xf]
    %v127 = vld [vmem:[#allocation5 + $0x1c] sm:$0xf]
    %v128 = vld [vmem:[#allocation5 + $0x20] sm:$0xf]
    %v129 = vld [vmem:[#allocation5 + $0x24] sm:$0xf]
    %v130 = vld [vmem:[#allocation5 + $0x28] sm:$0xf]
    %v131 = vld [vmem:[#allocation5 + $0x2c] sm:$0xf]
    %v132 = vld [vmem:[#allocation5 + $0x30] sm:$0xf]
    %v133 = vld [vmem:[#allocation5 + $0x34] sm:$0xf]
    %v134 = vld [vmem:[#allocation5 + $0x38] sm:$0xf]
    %v135 = vld [vmem:[#allocation5 + $0x3c] sm:$0xf]
    %v152 = vunpack.c.l.b16 %v120
    %v153 = vunpack.c.l.b16 %v121
    %v154 = vunpack.c.l.b16 %v122
    %v155 = vunpack.c.l.b16 %v123
    %v156 = vunpack.c.l.b16 %v124
    %v157 = vunpack.c.l.b16 %v125
    %v158 = vunpack.c.l.b16 %v126
    %v159 = vunpack.c.l.b16 %v127
    %v160 = vunpack.c.l.b16 %v128
    %v161 = vunpack.c.l.b16 %v129
    %v162 = vunpack.c.l.b16 %v130
    %v163 = vunpack.c.l.b16 %v131
    %v164 = vunpack.c.l.b16 %v132
    %v165 = vunpack.c.l.b16 %v133
    %v166 = vunpack.c.l.b16 %v134
    %v167 = vunpack.c.l.b16 %v135
    %v168 = vpack.c.b16 %v153, %v152
    %v169 = vpack.c.b16 %v155, %v154
    %v170 = vpack.c.b16 %v157, %v156
    %v171 = vpack.c.b16 %v159, %v158
    %v172 = vpack.c.b16 %v161, %v160
    %v173 = vpack.c.b16 %v163, %v162
    %v174 = vpack.c.b16 %v165, %v164
    %v175 = vpack.c.b16 %v167, %v166
    %184 = vmatprep.subr.bf16.mxu0 0
    %185 = vmatpush1.bf16.msra.mxu0 %v168
    %186 = vmatprep.subr.bf16.mxu0 0
    %187 = vmatpush1.bf16.msra.mxu0 %v169
    %188 = vmatprep.subr.bf16.mxu0 0
    %189 = vmatpush1.bf16.msra.mxu0 %v170
    %190 = vmatprep.subr.bf16.mxu0 0
    %191 = vmatpush1.bf16.msra.mxu0 %v171
    %192 = vmatprep.subr.bf16.mxu0 0
    %193 = vmatpush1.bf16.msra.mxu0 %v172
    %194 = vmatprep.subr.bf16.mxu0 0
    %195 = vmatpush1.bf16.msra.mxu0 %v173
    %196 = vmatprep.subr.bf16.mxu0 0
    %197 = vmatpush1.bf16.msra.mxu0 %v174
    %198 = vmatprep.subr.bf16.mxu0 0
    %199 = vmatpush1.bf16.msra.mxu0 %v175
    %200 = vmatprep.subr.bf16.mxu0 0
    %201 = vmatpush1.bf16.msra.mxu0 0
    %202 = vmatprep.subr.bf16.mxu0 0
    %203 = vmatpush1.bf16.msra.mxu0 0
    %204 = vmatprep.subr.bf16.mxu0 0
    %205 = vmatpush1.bf16.msra.mxu0 0
    %206 = vmatprep.subr.bf16.mxu0 0
    %207 = vmatpush1.bf16.msra.mxu0 0
    %208 = vmatprep.subr.bf16.mxu0 0
    %209 = vmatpush1.bf16.msra.mxu0 0
    %210 = vmatprep.subr.bf16.mxu0 0
    %211 = vmatpush1.bf16.msra.mxu0 0
    %212 = vmatprep.subr.bf16.mxu0 0
    %213 = vmatpush1.bf16.msra.mxu0 0
    %214 = vmatprep.subr.bf16.mxu0 0
    %215 = vmatpush1.bf16.msra.mxu0 0
    %216 = vmatprep.mubr.bf16.mxu0 0
    %217 = vmatmul.mubr.bf16.gmra.mrb[0].mxu0 %v119
    %v218 = vpop.f32.mrb[0].mxu0
    %v219 = vadd.f32 0.0, %v218
    %v220 = vpop.f32.mrb[0].mxu0
    %v221 = vpop.f32.mrb[0].mxu0
    %v222 = vadd.f32 0.0, %v221
    %v223 = vpop.f32.mrb[0].mxu0
    %224 = vdwg.mxu0
    %v225 = vmax.f32 %v219, 0.0
    %v226 = vmax.f32 %v222, 0.0
    %v227 = vpack.c.bf16 %v226, %v225
    %v228 = vld [vmem:[#allocation7] sm:$0xf]
    %v229 = vld [vmem:[#allocation7 + $0x4] sm:$0xf]
    %v230 = vld [vmem:[#allocation7 + $0x8] sm:$0xf]
    %v231 = vld [vmem:[#allocation7 + $0xc] sm:$0xf]
    %v232 = vld [vmem:[#allocation7 + $0x10] sm:$0xf]
    %v233 = vld [vmem:[#allocation7 + $0x14] sm:$0xf]
    %v234 = vld [vmem:[#allocation7 + $0x18] sm:$0xf]
    %v235 = vld [vmem:[#allocation7 + $0x1c] sm:$0xf]
    %v236 = vld [vmem:[#allocation7 + $0x20] sm:$0xf]
    %v237 = vld [vmem:[#allocation7 + $0x24] sm:$0xf]
    %v238 = vld [vmem:[#allocation7 + $0x28] sm:$0xf]
    %v239 = vld [vmem:[#allocation7 + $0x2c] sm:$0xf]
    %v240 = vld [vmem:[#allocation7 + $0x30] sm:$0xf]
    %v241 = vld [vmem:[#allocation7 + $0x34] sm:$0xf]
    %v242 = vld [vmem:[#allocation7 + $0x38] sm:$0xf]
    %v243 = vld [vmem:[#allocation7 + $0x3c] sm:$0xf]
    %v260 = vunpack.c.l.b16 %v228
    %v261 = vunpack.c.l.b16 %v229
    %v262 = vunpack.c.l.b16 %v230
    %v263 = vunpack.c.l.b16 %v231
    %v264 = vunpack.c.l.b16 %v232
    %v265 = vunpack.c.l.b16 %v233
    %v266 = vunpack.c.l.b16 %v234
    %v267 = vunpack.c.l.b16 %v235
    %v268 = vunpack.c.l.b16 %v236
    %v269 = vunpack.c.l.b16 %v237
    %v270 = vunpack.c.l.b16 %v238
    %v271 = vunpack.c.l.b16 %v239
    %v272 = vunpack.c.l.b16 %v240
    %v273 = vunpack.c.l.b16 %v241
    %v274 = vunpack.c.l.b16 %v242
    %v275 = vunpack.c.l.b16 %v243
    %v276 = vpack.c.b16 %v261, %v260
    %v277 = vpack.c.b16 %v263, %v262
    %v278 = vpack.c.b16 %v265, %v264
    %v279 = vpack.c.b16 %v267, %v266
    %v280 = vpack.c.b16 %v269, %v268
    %v281 = vpack.c.b16 %v271, %v270
    %v282 = vpack.c.b16 %v273, %v272
    %v283 = vpack.c.b16 %v275, %v274
    %292 = vmatprep.subr.bf16.mxu0 0
    %293 = vmatpush1.bf16.msra.mxu0 %v276
    %294 = vmatprep.subr.bf16.mxu0 0
    %295 = vmatpush1.bf16.msra.mxu0 %v277
    %296 = vmatprep.subr.bf16.mxu0 0
    %297 = vmatpush1.bf16.msra.mxu0 %v278
    %298 = vmatprep.subr.bf16.mxu0 0
    %299 = vmatpush1.bf16.msra.mxu0 %v279
    %300 = vmatprep.subr.bf16.mxu0 0
    %301 = vmatpush1.bf16.msra.mxu0 %v280
    %302 = vmatprep.subr.bf16.mxu0 0
    %303 = vmatpush1.bf16.msra.mxu0 %v281
    %304 = vmatprep.subr.bf16.mxu0 0
    %305 = vmatpush1.bf16.msra.mxu0 %v282
    %306 = vmatprep.subr.bf16.mxu0 0
    %307 = vmatpush1.bf16.msra.mxu0 %v283
    %308 = vmatprep.subr.bf16.mxu0 0
    %309 = vmatpush1.bf16.msra.mxu0 0
    %310 = vmatprep.subr.bf16.mxu0 0
    %311 = vmatpush1.bf16.msra.mxu0 0
    %312 = vmatprep.subr.bf16.mxu0 0
    %313 = vmatpush1.bf16.msra.mxu0 0
    %314 = vmatprep.subr.bf16.mxu0 0
    %315 = vmatpush1.bf16.msra.mxu0 0
    %316 = vmatprep.subr.bf16.mxu0 0
    %317 = vmatpush1.bf16.msra.mxu0 0
    %318 = vmatprep.subr.bf16.mxu0 0
    %319 = vmatpush1.bf16.msra.mxu0 0
    %320 = vmatprep.subr.bf16.mxu0 0
    %321 = vmatpush1.bf16.msra.mxu0 0
    %322 = vmatprep.subr.bf16.mxu0 0
    %323 = vmatpush1.bf16.msra.mxu0 0
    %324 = vmatprep.mubr.bf16.mxu0 0
    %325 = vmatmul.mubr.bf16.gmra.mrb[0].mxu0 %v227
    %v326 = vpop.f32.mrb[0].mxu0
    %v327 = vadd.f32 0.0, %v326
    %v328 = vpop.f32.mrb[0].mxu0
    %v329 = vpop.f32.mrb[0].mxu0
    %v330 = vadd.f32 0.0, %v329
    %v331 = vpop.f32.mrb[0].mxu0
    %332 = vdwg.mxu0
    %v333 = vmax.f32 %v327, 0.0
    %v334 = vmax.f32 %v330, 0.0
    %v335 = vpack.c.bf16 %v334, %v333
    %v336 = vld [vmem:[#allocation8] sm:$0xf]
    %v337 = vld [vmem:[#allocation8 + $0x4] sm:$0xf]
    %v338 = vld [vmem:[#allocation8 + $0x8] sm:$0xf]
    %v339 = vld [vmem:[#allocation8 + $0xc] sm:$0xf]
    %v340 = vld [vmem:[#allocation8 + $0x10] sm:$0xf]
    %v341 = vld [vmem:[#allocation8 + $0x14] sm:$0xf]
    %v342 = vld [vmem:[#allocation8 + $0x18] sm:$0xf]
    %v343 = vld [vmem:[#allocation8 + $0x1c] sm:$0xf]
    %v344 = vld [vmem:[#allocation8 + $0x20] sm:$0xf]
    %v345 = vld [vmem:[#allocation8 + $0x24] sm:$0xf]
    %v346 = vld [vmem:[#allocation8 + $0x28] sm:$0xf]
    %v347 = vld [vmem:[#allocation8 + $0x2c] sm:$0xf]
    %v348 = vld [vmem:[#allocation8 + $0x30] sm:$0xf]
    %v349 = vld [vmem:[#allocation8 + $0x34] sm:$0xf]
    %v350 = vld [vmem:[#allocation8 + $0x38] sm:$0xf]
    %v351 = vld [vmem:[#allocation8 + $0x3c] sm:$0xf]
    %v368 = vunpack.c.l.b16 %v336
    %v369 = vunpack.c.l.b16 %v337
    %v370 = vunpack.c.l.b16 %v338
    %v371 = vunpack.c.l.b16 %v339
    %v372 = vunpack.c.l.b16 %v340
    %v373 = vunpack.c.l.b16 %v341
    %v374 = vunpack.c.l.b16 %v342
    %v375 = vunpack.c.l.b16 %v343
    %v376 = vunpack.c.l.b16 %v344
    %v377 = vunpack.c.l.b16 %v345
    %v378 = vunpack.c.l.b16 %v346
    %v379 = vunpack.c.l.b16 %v347
    %v380 = vunpack.c.l.b16 %v348
    %v381 = vunpack.c.l.b16 %v349
    %v382 = vunpack.c.l.b16 %v350
    %v383 = vunpack.c.l.b16 %v351
    %v384 = vpack.c.b16 %v369, %v368
    %v385 = vpack.c.b16 %v371, %v370
    %v386 = vpack.c.b16 %v373, %v372
    %v387 = vpack.c.b16 %v375, %v374
    %v388 = vpack.c.b16 %v377, %v376
    %v389 = vpack.c.b16 %v379, %v378
    %v390 = vpack.c.b16 %v381, %v380
    %v391 = vpack.c.b16 %v383, %v382
    %400 = vmatprep.subr.bf16.mxu0 0
    %401 = vmatpush1.bf16.msra.mxu0 %v384
    %402 = vmatprep.subr.bf16.mxu0 0
    %403 = vmatpush1.bf16.msra.mxu0 %v385
    %404 = vmatprep.subr.bf16.mxu0 0
    %405 = vmatpush1.bf16.msra.mxu0 %v386
    %406 = vmatprep.subr.bf16.mxu0 0
    %407 = vmatpush1.bf16.msra.mxu0 %v387
    %408 = vmatprep.subr.bf16.mxu0 0
    %409 = vmatpush1.bf16.msra.mxu0 %v388
    %410 = vmatprep.subr.bf16.mxu0 0
    %411 = vmatpush1.bf16.msra.mxu0 %v389
    %412 = vmatprep.subr.bf16.mxu0 0
    %413 = vmatpush1.bf16.msra.mxu0 %v390
    %414 = vmatprep.subr.bf16.mxu0 0
    %415 = vmatpush1.bf16.msra.mxu0 %v391
    %416 = vmatprep.subr.bf16.mxu0 0
    %417 = vmatpush1.bf16.msra.mxu0 0
    %418 = vmatprep.subr.bf16.mxu0 0
    %419 = vmatpush1.bf16.msra.mxu0 0
    %420 = vmatprep.subr.bf16.mxu0 0
    %421 = vmatpush1.bf16.msra.mxu0 0
    %422 = vmatprep.subr.bf16.mxu0 0
    %423 = vmatpush1.bf16.msra.mxu0 0
    %424 = vmatprep.subr.bf16.mxu0 0
    %425 = vmatpush1.bf16.msra.mxu0 0
    %426 = vmatprep.subr.bf16.mxu0 0
    %427 = vmatpush1.bf16.msra.mxu0 0
    %428 = vmatprep.subr.bf16.mxu0 0
    %429 = vmatpush1.bf16.msra.mxu0 0
    %430 = vmatprep.subr.bf16.mxu0 0
    %431 = vmatpush1.bf16.msra.mxu0 0
    %432 = vmatprep.mubr.bf16.mxu0 0
    %433 = vmatmul.mubr.bf16.gmra.mrb[0].mxu0 %v335
    %v434 = vpop.f32.mrb[0].mxu0
    %v435 = vadd.f32 %v117, %v434
    %v436 = vpop.f32.mrb[0].mxu0
    %v437 = vpop.f32.mrb[0].mxu0
    %v438 = vadd.f32 %v118, %v437
    %v439 = vpop.f32.mrb[0].mxu0
    %440 = vdwg.mxu0
    %441 = vadd.xlane.f32.xlu0 %v435
    %v442 = vpop.xlane.xlu0 %441
    %443 = vadd.xlane.f32.xlu0 %v438
    %v444 = vpop.xlane.xlu0 %443
    %v445 = vmul.f32 %v442, 0.03125
    %v446 = vmul.f32 %v444, 0.03125
    %v447 = vsub.f32 %v435, %v445
    %v448 = vsub.f32 %v438, %v446
    %v449 = vmul.f32 %v447, %v447
    %v450 = vmul.f32 %v448, %v448
    %v451 = vld [vmem:[#allocation13] sm:$0x1]
    %v453 = vlaneseq
    %v454 = vshrl.u32 %v453, 7
    %v455 = vsub.s32 0, %v454
    %v456 = vrot.slane %v451, %v455
    %v458 = vmul.f32 %v449, %v456
    %v459 = vmul.f32 %v450, %v456
    %460 = vadd.xlane.f32.xlu0 %v458
    %v461 = vpop.xlane.xlu0 %460
    %462 = vadd.xlane.f32.xlu0 %v459
    %v463 = vpop.xlane.xlu0 %462
    %v464 = vmul.f32 %v461, 0.032258064
    %v465 = vmul.f32 %v463, 0.032258064
    %v466 = vrsqrt.pop %v464
    %v467 = vmul.f32 %v464, %v466
    %vm468 = vcmp.eq.f32.partialorder %v464, inf
    %v469 = vsel %vm468, %v464, %v467
    %vm470 = vcmp.eq.f32.partialorder %v464, 0.0
    %v471 = vand.u32 %v464, 2147483648
    %v472 = vsel %vm470, %v471, %v469
    %v473 = vrsqrt.pop %v465
    %v474 = vmul.f32 %v465, %v473
    %vm475 = vcmp.eq.f32.partialorder %v465, inf
    %v476 = vsel %vm475, %v465, %v474
    %vm477 = vcmp.eq.f32.partialorder %v465, 0.0
    %v478 = vand.u32 %v465, 2147483648
    %v479 = vsel %vm477, %v478, %v476
    %v480 = vadd.f32 %v472, 1e-06
    %v481 = vadd.f32 %v479, 1e-06
    %v482 = vrcp.pop %v480
    %v483 = vrcp.pop %v481
    %v484 = vld [vmem:[#allocation10] sm:$0x1]
    %v486 = vlaneseq
    %v487 = vshrl.u32 %v486, 7
    %v488 = vsub.s32 0, %v487
    %v489 = vrot.slane %v484, %v488
    %v491 = vmul.f32 %v489, %v447
    %v492 = vmul.f32 %v489, %v448
    %v493 = vmul.f32 %v491, %v482
    %v494 = vmul.f32 %v492, %v483
    %v495 = vld [vmem:[#allocation11] sm:$0x1]
    %v497 = vlaneseq
    %v498 = vshrl.u32 %v497, 7
    %v499 = vsub.s32 0, %v498
    %v500 = vrot.slane %v495, %v499
    %v502 = vadd.f32 %v493, %v500
    %v503 = vadd.f32 %v494, %v500
    %504 = vst [vmem:[#allocation14] sm:$0xff] %v502
    %505 = vst [vmem:[#allocation14 + $0x8] sm:$0xff] %v503
    // Predicated region
    $region58: #{tpu_custom_call.1} parent=1 // pred_check
      _
    $region59: #{tpu_custom_call.1} parent=1 // pred_check_branch
      %507 = sbr.rel (0) target = $region61
    $region60: #{tpu_custom_call.1} parent=1 // pred_region
      %s509 = ssub.s32 256, 256
      %510 = vsyncadd [#allocation4], %s509
      %s511 = sshll.u32 [#allocation14], 4
      %s512 = int_to_ptr.vmem [resolvable:$true] %s511
      %517 = dma.vmem_to_hbm [thread:$0]  %s512, 256, %s7, [#allocation4], 128, 128, 8
    $region61: #{tpu_custom_call.1} parent=1 // pred_fallthru
      _
    // Predicated region
    $region62: #{tpu_custom_call.1} parent=1 // pred_check
      _
    $region63: #{tpu_custom_call.1} parent=1 // pred_check_branch
      %519 = sbr.rel (0) target = $region65
    $region64: #{tpu_custom_call.1} parent=1 // pred_region
      %520 = dma.done [#allocation4], 256
    $region65: #{tpu_custom_call.1} parent=1 // pred_fallthru
      _
    %521 = vsyncpa [#allocation3], 1
    %522 = vsyncpa [#allocation6], 1
    %523 = vsyncpa [#allocation9], 1
    %524 = vsyncpa [#allocation12], 1
    %525 = vsyncpa [#allocation4], 1

// kernel: tpu_custom_call.1
$region0: #{tpu_custom_call.1}
  #allocation0 [shape = 'u32[]', space=smem, size = 0x4, offset = 0x4, fixed_abs, tag = 'smem constant byte address 0x4 - core index']
  #allocation1 [shape = 'u32[144,128]{1,0:T(1,128)}', space=vmem, size = 0x12000, scoped, tag = 'internal scratch']
  %s0 = inlined_call_operand.hbm [shape: f32[16,128], index: 0, kind: input, shape index: {}]
  %s1 = inlined_call_operand.hbm [shape: bf16[128,128], index: 1, kind: input, shape index: {}]
  %s2 = inlined_call_operand.hbm [shape: bf16[128,128], index: 2, kind: input, shape index: {}]
  %s3 = inlined_call_operand.hbm [shape: bf16[128,128], index: 3, kind: input, shape index: {}]
  %s4 = inlined_call_operand.hbm [shape: f32[1,128], index: 4, kind: input, shape index: {}]
  %s5 = inlined_call_operand.hbm [shape: f32[1,128], index: 5, kind: input, shape index: {}]
  %s6 = inlined_call_operand.hbm [shape: f32[1,128], index: 6, kind: input, shape index: {}]
  %s7 = inlined_call_operand.hbm [shape: f32[16,128], index: 7, kind: output, shape index: {}]
  %s8 = sld [smem:[#allocation0]]
  $region66: #{tpu_custom_call.1} parent=0
    _
  %s10 = ssub.s32 1, %s8
  %s11 = scalar_select 0, %s10, %s8
  $region1: #{tpu_custom_call.1} parent=0
    #allocation2 [shape = 'u8[8192]{0}', space=vmem, size = 0x2000, scoped, tag = 'input window, operand 0, single buffered']
    #allocation3 [shape = 's32[1]{0}', space=sflag, size = 0x4, scoped, tag = 'scoped memory for tpu_custom_call.1']
    #allocation4 [shape = 's32[1]{0}', space=sflag, size = 0x4, scoped, tag = 'scoped memory for tpu_custom_call.1']
    #allocation5 [shape = 'u8[32768]{0}', space=vmem, size = 0x8000, scoped, tag = 'input window, operand 1, single buffered']
    #allocation6 [shape = 's32[1]{0}', space=sflag, size = 0x4, scoped, tag = 'scoped memory for tpu_custom_call.1']
    #allocation7 [shape = 'u8[32768]{0}', space=vmem, size = 0x8000, scoped, tag = 'input window, operand 2, single buffered']
    #allocation8 [shape = 'u8[32768]{0}', space=vmem, size = 0x8000, scoped, tag = 'input window, operand 3, single buffered']
    #allocation9 [shape = 's32[1]{0}', space=sflag, size = 0x4, scoped, tag = 'scoped memory for tpu_custom_call.1']
    #allocation10 [shape = 'u8[512]{0}', space=vmem, size = 0x400, scoped, tag = 'input window, operand 4, single buffered']
    #allocation11 [shape = 'u8[512]{0}', space=vmem, size = 0x400, scoped, tag = 'input window, operand 5, single buffered']
    #allocation12 [shape = 's32[1]{0}', space=sflag, size = 0x4, scoped, tag = 'scoped memory for tpu_custom_call.1']
    #allocation13 [shape = 'u8[512]{0}', space=vmem, size = 0x400, scoped, tag = 'input window, operand 6, single buffered']
    #allocation14 [shape = 'u8[8192]{0}', space=vmem, size = 0x2000, scoped, tag = 'output window, operand 0, single buffered']
    %12 = vsyncpa [#allocation3], 0
    %13 = vsyncpa [#allocation6], 0
    %14 = vsyncpa [#allocation9], 0
    %15 = vsyncpa [#allocation12], 0
    %16 = vsyncpa [#allocation4], 0
    // Predicated region
    $region2: #{tpu_custom_call.1} parent=1 // pred_check
      _
    $region3: #{tpu_custom_call.1} parent=1 // pred_check_branch
      %18 = sbr.rel (0) target = $region5
    $region4: #{tpu_custom_call.1} parent=1 // pred_region
      %s20 = ssub.s32 256, 256
      %21 = vsyncadd [#allocation3], %s20
      %s22 = sshll.u32 [#allocation2], 4
      %s23 = int_to_ptr.vmem [resolvable:$true] %s22
      %28 = dma.hbm_to_vmem [thread:$0]  %s0, 256, %s23, [#allocation3], 128, 128, 8
    $region5: #{tpu_custom_call.1} parent=1 // pred_fallthru
      _
    // Predicated region
    $region6: #{tpu_custom_call.1} parent=1 // pred_check
      _
    $region7: #{tpu_custom_call.1} parent=1 // pred_check_branch
      %30 = sbr.rel (0) target = $region9
    $region8: #{tpu_custom_call.1} parent=1 // pred_region
      %s32 = ssub.s32 1024, 1024
      %33 = vsyncadd [#allocation6], %s32
      %s34 = sshll.u32 [#allocation5], 4
      %s35 = int_to_ptr.vmem [resolvable:$true] %s34
      %40 = dma.hbm_to_vmem [thread:$0]  %s1, 1024, %s35, [#allocation6], 64, 64, 4
    $region9: #{tpu_custom_call.1} parent=1 // pred_fallthru
      _
    // Predicated region
    $region10: #{tpu_custom_call.1} parent=1 // pred_check
      _
    $region11: #{tpu_custom_call.1} parent=1 // pred_check_branch
      %42 = sbr.rel (0) target = $region13
    $region12: #{tpu_custom_call.1} parent=1 // pred_region
      %s44 = ssub.s32 1024, 1024
      %45 = vsyncadd [#allocation6], %s44
      %s46 = sshll.u32 [#allocation7], 4
      %s47 = int_to_ptr.vmem [resolvable:$true] %s46
      %52 = dma.hbm_to_vmem [thread:$0]  %s2, 1024, %s47, [#allocation6], 64, 64, 4
    $region13: #{tpu_custom_call.1} parent=1 // pred_fallthru
      _
    // Predicated region
    $region14: #{tpu_custom_call.1} parent=1 // pred_check
      _
    $region15: #{tpu_custom_call.1} parent=1 // pred_check_branch
      %54 = sbr.rel (0) target = $region17
    $region16: #{tpu_custom_call.1} parent=1 // pred_region
      %s56 = ssub.s32 1024, 1024
      %57 = vsyncadd [#allocation9], %s56
      %s58 = sshll.u32 [#allocation8], 4
      %s59 = int_to_ptr.vmem [resolvable:$true] %s58
      %64 = dma.hbm_to_vmem [thread:$0]  %s3, 1024, %s59, [#allocation9], 64, 64, 4
    $region17: #{tpu_custom_call.1} parent=1 // pred_fallthru
      _
    // Predicated region
    $region18: #{tpu_custom_call.1} parent=1 // pred_check
      _
    $region19: #{tpu_custom_call.1} parent=1 // pred_check_branch
      %66 = sbr.rel (0) target = $region21
    $region20: #{tpu_custom_call.1} parent=1 // pred_region
      %s68 = ssub.s32 16, 16
      %69 = vsyncadd [#allocation9], %s68
      %s71 = sshll.u32 [#allocation10], 4
      %s72 = int_to_ptr.vmem [resolvable:$true] %s71
      %74 = dma.hbm_to_vmem [thread:$0]  %s4, 16, %s72, [#allocation9]
    $region21: #{tpu_custom_call.1} parent=1 // pred_fallthru
      _
    // Predicated region
    $region22: #{tpu_custom_call.1} parent=1 // pred_check
      _
    $region23: #{tpu_custom_call.1} parent=1 // pred_check_branch
      %76 = sbr.rel (0) target = $region25
    $region24: #{tpu_custom_call.1} parent=1 // pred_region
      %s78 = ssub.s32 16, 16
      %79 = vsyncadd [#allocation12], %s78
      %s81 = sshll.u32 [#allocation11], 4
      %s82 = int_to_ptr.vmem [resolvable:$true] %s81
      %84 = dma.hbm_to_vmem [thread:$0]  %s5, 16, %s82, [#allocation12]
    $region25: #{tpu_custom_call.1} parent=1 // pred_fallthru
      _
    // Predicated region
    $region26: #{tpu_custom_call.1} parent=1 // pred_check
      _
    $region27: #{tpu_custom_call.1} parent=1 // pred_check_branch
      %86 = sbr.rel (0) target = $region29
    $region28: #{tpu_custom_call.1} parent=1 // pred_region
      %s88 = ssub.s32 16, 16
      %89 = vsyncadd [#allocation12], %s88
      %s91 = sshll.u32 [#allocation13], 4
      %s92 = int_to_ptr.vmem [resolvable:$true] %s91
      %94 = dma.hbm_to_vmem [thread:$0]  %s6, 16, %s92, [#allocation12]
    $region29: #{tpu_custom_call.1} parent=1 // pred_fallthru
      _
    // Predicated region
    $region30: #{tpu_custom_call.1} parent=1 // pred_check
      _
    $region31: #{tpu_custom_call.1} parent=1 // pred_check_branch
      %96 = sbr.rel (0) target = $region33
    $region32: #{tpu_custom_call.1} parent=1 // pred_region
      %97 = dma.done [#allocation3], 256
    $region33: #{tpu_custom_call.1} parent=1 // pred_fallthru
      _
    // Predicated region
    $region34: #{tpu_custom_call.1} parent=1 // pred_check
      _
    $region35: #{tpu_custom_call.1} parent=1 // pred_check_branch
      %99 = sbr.rel (0) target = $region37
    $region36: #{tpu_custom_call.1} parent=1 // pred_region
      %100 = dma.done [#allocation6], 1024
    $region37: #{tpu_custom_call.1} parent=1 // pred_fallthru
      _
    // Predicated region
    $region38: #{tpu_custom_call.1} parent=1 // pred_check
      _
    $region39: #{tpu_custom_call.1} parent=1 // pred_check_branch
      %102 = sbr.rel (0) target = $region41
    $region40: #{tpu_custom_call.1} parent=1 // pred_region
      %103 = dma.done [#allocation6], 1024
    $region41: #{tpu_custom_call.1} parent=1 // pred_fallthru
      _
    // Predicated region
    $region42: #{tpu_custom_call.1} parent=1 // pred_check
      _
    $region43: #{tpu_custom_call.1} parent=1 // pred_check_branch
      %105 = sbr.rel (0) target = $region45
    $region44: #{tpu_custom_call.1} parent=1 // pred_region
      %106 = dma.done [#allocation9], 1024
    $region45: #{tpu_custom_call.1} parent=1 // pred_fallthru
      _
    // Predicated region
    $region46: #{tpu_custom_call.1} parent=1 // pred_check
      _
    $region47: #{tpu_custom_call.1} parent=1 // pred_check_branch
      %108 = sbr.rel (0) target = $region49
    $region48: #{tpu_custom_call.1} parent=1 // pred_region
      %109 = dma.done [#allocation9], 16
    $region49: #{tpu_custom_call.1} parent=1 // pred_fallthru
      _
    // Predicated region
    $region50: #{tpu_custom_call.1} parent=1 // pred_check
      _
    $region51: #{tpu_custom_call.1} parent=1 // pred_check_branch
      %111 = sbr.rel (0) target = $region53
    $region52: #{tpu_custom_call.1} parent=1 // pred_region
      %112 = dma.done [#allocation12], 16
    $region53: #{tpu_custom_call.1} parent=1 // pred_fallthru
      _
    // Predicated region
    $region54: #{tpu_custom_call.1} parent=1 // pred_check
      _
    $region55: #{tpu_custom_call.1} parent=1 // pred_check_branch
      %114 = sbr.rel (0) target = $region57
    $region56: #{tpu_custom_call.1} parent=1 // pred_region
      %115 = dma.done [#allocation12], 16
    $region57: #{tpu_custom_call.1} parent=1 // pred_fallthru
      _
    %v117 = vld [vmem:[#allocation2] sm:$0xff]
    %v118 = vld [vmem:[#allocation2 + $0x8] sm:$0xff]
    %v119 = vpack.c.bf16 %v118, %v117
    %v120 = vld [vmem:[#allocation5] sm:$0xf]
    %v121 = vld [vmem:[#allocation5 + $0x4] sm:$0xf]
    %v122 = vld [vmem:[#allocation5 + $0x8] sm:$0xf]
    %v123 = vld [vmem:[#allocation5 + $0xc] sm:$0xf]
    %v124 = vld [vmem:[#allocation5 + $0x10] sm:$0xf]
    %v125 = vld [vmem:[#allocation5 + $0x14] sm:$0xf]
    %v126 = vld [vmem:[#allocation5 + $0x18] sm:$0xf]
    %v127 = vld [vmem:[#allocation5 + $0x1c] sm:$0xf]
    %v128 = vld [vmem:[#allocation5 + $0x20] sm:$0xf]
    %v129 = vld [vmem:[#allocation5 + $0x24] sm:$0xf]
    %v130 = vld [vmem:[#allocation5 + $0x28] sm:$0xf]
    %v131 = vld [vmem:[#allocation5 + $0x2c] sm:$0xf]
    %v132 = vld [vmem:[#allocation5 + $0x30] sm:$0xf]
    %v133 = vld [vmem:[#allocation5 + $0x34] sm:$0xf]
    %v134 = vld [vmem:[#allocation5 + $0x38] sm:$0xf]
    %v135 = vld [vmem:[#allocation5 + $0x3c] sm:$0xf]
    %v152 = vunpack.c.l.b16 %v120
    %v153 = vunpack.c.l.b16 %v121
    %v154 = vunpack.c.l.b16 %v122
    %v155 = vunpack.c.l.b16 %v123
    %v156 = vunpack.c.l.b16 %v124
    %v157 = vunpack.c.l.b16 %v125
    %v158 = vunpack.c.l.b16 %v126
    %v159 = vunpack.c.l.b16 %v127
    %v160 = vunpack.c.l.b16 %v128
    %v161 = vunpack.c.l.b16 %v129
    %v162 = vunpack.c.l.b16 %v130
    %v163 = vunpack.c.l.b16 %v131
    %v164 = vunpack.c.l.b16 %v132
    %v165 = vunpack.c.l.b16 %v133
    %v166 = vunpack.c.l.b16 %v134
    %v167 = vunpack.c.l.b16 %v135
    %v168 = vpack.c.b16 %v153, %v152
    %v169 = vpack.c.b16 %v155, %v154
    %v170 = vpack.c.b16 %v157, %v156
    %v171 = vpack.c.b16 %v159, %v158
    %v172 = vpack.c.b16 %v161, %v160
    %v173 = vpack.c.b16 %v163, %v162
    %v174 = vpack.c.b16 %v165, %v164
    %v175 = vpack.c.b16 %v167, %v166
    %184 = vmatprep.subr.bf16.mxu0 0
    %185 = vmatpush1.bf16.msra.mxu0 %v168
    %186 = vmatprep.subr.bf16.mxu0 0
    %187 = vmatpush1.bf16.msra.mxu0 %v169
    %188 = vmatprep.subr.bf16.mxu0 0
    %189 = vmatpush1.bf16.msra.mxu0 %v170
    %190 = vmatprep.subr.bf16.mxu0 0
    %191 = vmatpush1.bf16.msra.mxu0 %v171
    %192 = vmatprep.subr.bf16.mxu0 0
    %193 = vmatpush1.bf16.msra.mxu0 %v172
    %194 = vmatprep.subr.bf16.mxu0 0
    %195 = vmatpush1.bf16.msra.mxu0 %v173
    %196 = vmatprep.subr.bf16.mxu0 0
    %197 = vmatpush1.bf16.msra.mxu0 %v174
    %198 = vmatprep.subr.bf16.mxu0 0
    %199 = vmatpush1.bf16.msra.mxu0 %v175
    %200 = vmatprep.subr.bf16.mxu0 0
    %201 = vmatpush1.bf16.msra.mxu0 0
    %202 = vmatprep.subr.bf16.mxu0 0
    %203 = vmatpush1.bf16.msra.mxu0 0
    %204 = vmatprep.subr.bf16.mxu0 0
    %205 = vmatpush1.bf16.msra.mxu0 0
    %206 = vmatprep.subr.bf16.mxu0 0
    %207 = vmatpush1.bf16.msra.mxu0 0
    %208 = vmatprep.subr.bf16.mxu0 0
    %209 = vmatpush1.bf16.msra.mxu0 0
    %210 = vmatprep.subr.bf16.mxu0 0
    %211 = vmatpush1.bf16.msra.mxu0 0
    %212 = vmatprep.subr.bf16.mxu0 0
    %213 = vmatpush1.bf16.msra.mxu0 0
    %214 = vmatprep.subr.bf16.mxu0 0
    %215 = vmatpush1.bf16.msra.mxu0 0
    %216 = vmatprep.mubr.bf16.mxu0 0
    %217 = vmatmul.mubr.bf16.gmra.mrb[0].mxu0 %v119
    %v218 = vpop.f32.mrb[0].mxu0
    %v219 = vadd.f32 0.0, %v218
    %v220 = vpop.f32.mrb[0].mxu0
    %v221 = vpop.f32.mrb[0].mxu0
    %v222 = vadd.f32 0.0, %v221
    %v223 = vpop.f32.mrb[0].mxu0
    %224 = vdwg.mxu0
    %v225 = vmax.f32 %v219, 0.0
    %v226 = vmax.f32 %v222, 0.0
    %v227 = vpack.c.bf16 %v226, %v225
    %v228 = vld [vmem:[#allocation7] sm:$0xf]
    %v229 = vld [vmem:[#allocation7 + $0x4] sm:$0xf]
    %v230 = vld [vmem:[#allocation7 + $0x8] sm:$0xf]
    %v231 = vld [vmem:[#allocation7 + $0xc] sm:$0xf]
    %v232 = vld [vmem:[#allocation7 + $0x10] sm:$0xf]
    %v233 = vld [vmem:[#allocation7 + $0x14] sm:$0xf]
    %v234 = vld [vmem:[#allocation7 + $0x18] sm:$0xf]
    %v235 = vld [vmem:[#allocation7 + $0x1c] sm:$0xf]
    %v236 = vld [vmem:[#allocation7 + $0x20] sm:$0xf]
    %v237 = vld [vmem:[#allocation7 + $0x24] sm:$0xf]
    %v238 = vld [vmem:[#allocation7 + $0x28] sm:$0xf]
    %v239 = vld [vmem:[#allocation7 + $0x2c] sm:$0xf]
    %v240 = vld [vmem:[#allocation7 + $0x30] sm:$0xf]
    %v241 = vld [vmem:[#allocation7 + $0x34] sm:$0xf]
    %v242 = vld [vmem:[#allocation7 + $0x38] sm:$0xf]
    %v243 = vld [vmem:[#allocation7 + $0x3c] sm:$0xf]
    %v260 = vunpack.c.l.b16 %v228
    %v261 = vunpack.c.l.b16 %v229
    %v262 = vunpack.c.l.b16 %v230
    %v263 = vunpack.c.l.b16 %v231
    %v264 = vunpack.c.l.b16 %v232
    %v265 = vunpack.c.l.b16 %v233
    %v266 = vunpack.c.l.b16 %v234
    %v267 = vunpack.c.l.b16 %v235
    %v268 = vunpack.c.l.b16 %v236
    %v269 = vunpack.c.l.b16 %v237
    %v270 = vunpack.c.l.b16 %v238
    %v271 = vunpack.c.l.b16 %v239
    %v272 = vunpack.c.l.b16 %v240
    %v273 = vunpack.c.l.b16 %v241
    %v274 = vunpack.c.l.b16 %v242
    %v275 = vunpack.c.l.b16 %v243
    %v276 = vpack.c.b16 %v261, %v260
    %v277 = vpack.c.b16 %v263, %v262
    %v278 = vpack.c.b16 %v265, %v264
    %v279 = vpack.c.b16 %v267, %v266
    %v280 = vpack.c.b16 %v269, %v268
    %v281 = vpack.c.b16 %v271, %v270
    %v282 = vpack.c.b16 %v273, %v272
    %v283 = vpack.c.b16 %v275, %v274
    %292 = vmatprep.subr.bf16.mxu0 0
    %293 = vmatpush1.bf16.msra.mxu0 %v276
    %294 = vmatprep.subr.bf16.mxu0 0
    %295 = vmatpush1.bf16.msra.mxu0 %v277
    %296 = vmatprep.subr.bf16.mxu0 0
    %297 = vmatpush1.bf16.msra.mxu0 %v278
    %298 = vmatprep.subr.bf16.mxu0 0
    %299 = vmatpush1.bf16.msra.mxu0 %v279
    %300 = vmatprep.subr.bf16.mxu0 0
    %301 = vmatpush1.bf16.msra.mxu0 %v280
    %302 = vmatprep.subr.bf16.mxu0 0
    %303 = vmatpush1.bf16.msra.mxu0 %v281
    %304 = vmatprep.subr.bf16.mxu0 0
    %305 = vmatpush1.bf16.msra.mxu0 %v282
    %306 = vmatprep.subr.bf16.mxu0 0
    %307 = vmatpush1.bf16.msra.mxu0 %v283
    %308 = vmatprep.subr.bf16.mxu0 0
    %309 = vmatpush1.bf16.msra.mxu0 0
    %310 = vmatprep.subr.bf16.mxu0 0
    %311 = vmatpush1.bf16.msra.mxu0 0
    %312 = vmatprep.subr.bf16.mxu0 0
    %313 = vmatpush1.bf16.msra.mxu0 0
    %314 = vmatprep.subr.bf16.mxu0 0
    %315 = vmatpush1.bf16.msra.mxu0 0
    %316 = vmatprep.subr.bf16.mxu0 0
    %317 = vmatpush1.bf16.msra.mxu0 0
    %318 = vmatprep.subr.bf16.mxu0 0
    %319 = vmatpush1.bf16.msra.mxu0 0
    %320 = vmatprep.subr.bf16.mxu0 0
    %321 = vmatpush1.bf16.msra.mxu0 0
    %322 = vmatprep.subr.bf16.mxu0 0
    %323 = vmatpush1.bf16.msra.mxu0 0
    %324 = vmatprep.mubr.bf16.mxu0 0
    %325 = vmatmul.mubr.bf16.gmra.mrb[0].mxu0 %v227
    %v326 = vpop.f32.mrb[0].mxu0
    %v327 = vadd.f32 0.0, %v326
    %v328 = vpop.f32.mrb[0].mxu0
    %v329 = vpop.f32.mrb[0].mxu0
    %v330 = vadd.f32 0.0, %v329
    %v331 = vpop.f32.mrb[0].mxu0
    %332 = vdwg.mxu0
    %v333 = vmax.f32 %v327, 0.0
    %v334 = vmax.f32 %v330, 0.0
    %v335 = vpack.c.bf16 %v334, %v333
    %v336 = vld [vmem:[#allocation8] sm:$0xf]
    %v337 = vld [vmem:[#allocation8 + $0x4] sm:$0xf]
    %v338 = vld [vmem:[#allocation8 + $0x8] sm:$0xf]
    %v339 = vld [vmem:[#allocation8 + $0xc] sm:$0xf]
    %v340 = vld [vmem:[#allocation8 + $0x10] sm:$0xf]
    %v341 = vld [vmem:[#allocation8 + $0x14] sm:$0xf]
    %v342 = vld [vmem:[#allocation8 + $0x18] sm:$0xf]
    %v343 = vld [vmem:[#allocation8 + $0x1c] sm:$0xf]
    %v344 = vld [vmem:[#allocation8 + $0x20] sm:$0xf]
    %v345 = vld [vmem:[#allocation8 + $0x24] sm:$0xf]
    %v346 = vld [vmem:[#allocation8 + $0x28] sm:$0xf]
    %v347 = vld [vmem:[#allocation8 + $0x2c] sm:$0xf]
    %v348 = vld [vmem:[#allocation8 + $0x30] sm:$0xf]
    %v349 = vld [vmem:[#allocation8 + $0x34] sm:$0xf]
    %v350 = vld [vmem:[#allocation8 + $0x38] sm:$0xf]
    %v351 = vld [vmem:[#allocation8 + $0x3c] sm:$0xf]
    %v368 = vunpack.c.l.b16 %v336
    %v369 = vunpack.c.l.b16 %v337
    %v370 = vunpack.c.l.b16 %v338
    %v371 = vunpack.c.l.b16 %v339
    %v372 = vunpack.c.l.b16 %v340
    %v373 = vunpack.c.l.b16 %v341
    %v374 = vunpack.c.l.b16 %v342
    %v375 = vunpack.c.l.b16 %v343
    %v376 = vunpack.c.l.b16 %v344
    %v377 = vunpack.c.l.b16 %v345
    %v378 = vunpack.c.l.b16 %v346
    %v379 = vunpack.c.l.b16 %v347
    %v380 = vunpack.c.l.b16 %v348
    %v381 = vunpack.c.l.b16 %v349
    %v382 = vunpack.c.l.b16 %v350
    %v383 = vunpack.c.l.b16 %v351
    %v384 = vpack.c.b16 %v369, %v368
    %v385 = vpack.c.b16 %v371, %v370
    %v386 = vpack.c.b16 %v373, %v372
    %v387 = vpack.c.b16 %v375, %v374
    %v388 = vpack.c.b16 %v377, %v376
    %v389 = vpack.c.b16 %v379, %v378
    %v390 = vpack.c.b16 %v381, %v380
    %v391 = vpack.c.b16 %v383, %v382
    %400 = vmatprep.subr.bf16.mxu0 0
    %401 = vmatpush1.bf16.msra.mxu0 %v384
    %402 = vmatprep.subr.bf16.mxu0 0
    %403 = vmatpush1.bf16.msra.mxu0 %v385
    %404 = vmatprep.subr.bf16.mxu0 0
    %405 = vmatpush1.bf16.msra.mxu0 %v386
    %406 = vmatprep.subr.bf16.mxu0 0
    %407 = vmatpush1.bf16.msra.mxu0 %v387
    %408 = vmatprep.subr.bf16.mxu0 0
    %409 = vmatpush1.bf16.msra.mxu0 %v388
    %410 = vmatprep.subr.bf16.mxu0 0
    %411 = vmatpush1.bf16.msra.mxu0 %v389
    %412 = vmatprep.subr.bf16.mxu0 0
    %413 = vmatpush1.bf16.msra.mxu0 %v390
    %414 = vmatprep.subr.bf16.mxu0 0
    %415 = vmatpush1.bf16.msra.mxu0 %v391
    %416 = vmatprep.subr.bf16.mxu0 0
    %417 = vmatpush1.bf16.msra.mxu0 0
    %418 = vmatprep.subr.bf16.mxu0 0
    %419 = vmatpush1.bf16.msra.mxu0 0
    %420 = vmatprep.subr.bf16.mxu0 0
    %421 = vmatpush1.bf16.msra.mxu0 0
    %422 = vmatprep.subr.bf16.mxu0 0
    %423 = vmatpush1.bf16.msra.mxu0 0
    %424 = vmatprep.subr.bf16.mxu0 0
    %425 = vmatpush1.bf16.msra.mxu0 0
    %426 = vmatprep.subr.bf16.mxu0 0
    %427 = vmatpush1.bf16.msra.mxu0 0
    %428 = vmatprep.subr.bf16.mxu0 0
    %429 = vmatpush1.bf16.msra.mxu0 0
    %430 = vmatprep.subr.bf16.mxu0 0
    %431 = vmatpush1.bf16.msra.mxu0 0
    %432 = vmatprep.mubr.bf16.mxu0 0
    %433 = vmatmul.mubr.bf16.gmra.mrb[0].mxu0 %v335
    %v434 = vpop.f32.mrb[0].mxu0
    %v435 = vadd.f32 %v117, %v434
    %v436 = vpop.f32.mrb[0].mxu0
    %v437 = vpop.f32.mrb[0].mxu0
    %v438 = vadd.f32 %v118, %v437
    %v439 = vpop.f32.mrb[0].mxu0
    %440 = vdwg.mxu0
    %441 = vadd.xlane.f32.xlu0 %v435
    %v442 = vpop.xlane.xlu0 %441
    %443 = vadd.xlane.f32.xlu0 %v438
    %v444 = vpop.xlane.xlu0 %443
    %v445 = vmul.f32 %v442, 0.03125
    %v446 = vmul.f32 %v444, 0.03125
    %v447 = vsub.f32 %v435, %v445
    %v448 = vsub.f32 %v438, %v446
    %v449 = vmul.f32 %v447, %v447
    %v450 = vmul.f32 %v448, %v448
    %v451 = vld [vmem:[#allocation13] sm:$0x1]
    %v453 = vlaneseq
    %v454 = vshrl.u32 %v453, 7
    %v455 = vsub.s32 0, %v454
    %v456 = vrot.slane %v451, %v455
    %v458 = vmul.f32 %v449, %v456
    %v459 = vmul.f32 %v450, %v456
    %460 = vadd.xlane.f32.xlu0 %v458
    %v461 = vpop.xlane.xlu0 %460
    %462 = vadd.xlane.f32.xlu0 %v459
    %v463 = vpop.xlane.xlu0 %462
    %v464 = vmul.f32 %v461, 0.032258064
    %v465 = vmul.f32 %v463, 0.032258064
    %v466 = vrsqrt.pop %v464
    %v467 = vmul.f32 %v464, %v466
    %vm468 = vcmp.eq.f32.partialorder %v464, inf
    %v469 = vsel %vm468, %v464, %v467
    %vm470 = vcmp.eq.f32.partialorder %v464, 0.0
    %v471 = vand.u32 %v464, 2147483648
    %v472 = vsel %vm470, %v471, %v469
    %v473 = vrsqrt.pop %v465
    %v474 = vmul.f32 %v465, %v473
    %vm475 = vcmp.eq.f32.partialorder %v465, inf
    %v476 = vsel %vm475, %v465, %v474
    %vm477 = vcmp.eq.f32.partialorder %v465, 0.0
    %v478 = vand.u32 %v465, 2147483648
    %v479 = vsel %vm477, %v478, %v476
    %v480 = vadd.f32 %v472, 1e-06
    %v481 = vadd.f32 %v479, 1e-06
    %v482 = vrcp.pop %v480
    %v483 = vrcp.pop %v481
    %v484 = vld [vmem:[#allocation10] sm:$0x1]
    %v486 = vlaneseq
    %v487 = vshrl.u32 %v486, 7
    %v488 = vsub.s32 0, %v487
    %v489 = vrot.slane %v484, %v488
    %v491 = vmul.f32 %v489, %v447
    %v492 = vmul.f32 %v489, %v448
    %v493 = vmul.f32 %v491, %v482
    %v494 = vmul.f32 %v492, %v483
    %v495 = vld [vmem:[#allocation11] sm:$0x1]
    %v497 = vlaneseq
    %v498 = vshrl.u32 %v497, 7
    %v499 = vsub.s32 0, %v498
    %v500 = vrot.slane %v495, %v499
    %v502 = vadd.f32 %v493, %v500
    %v503 = vadd.f32 %v494, %v500
    %504 = vst [vmem:[#allocation14] sm:$0xff] %v502
    %505 = vst [vmem:[#allocation14 + $0x8] sm:$0xff] %v503
    // Predicated region
    $region58: #{tpu_custom_call.1} parent=1 // pred_check
      _
    $region59: #{tpu_custom_call.1} parent=1 // pred_check_branch
      %507 = sbr.rel (0) target = $region61
    $region60: #{tpu_custom_call.1} parent=1 // pred_region
      %s509 = ssub.s32 256, 256
      %510 = vsyncadd [#allocation4], %s509
      %s511 = sshll.u32 [#allocation14], 4
      %s512 = int_to_ptr.vmem [resolvable:$true] %s511
      %517 = dma.vmem_to_hbm [thread:$0]  %s512, 256, %s7, [#allocation4], 128, 128, 8
    $region61: #{tpu_custom_call.1} parent=1 // pred_fallthru
      _
    // Predicated region
    $region62: #{tpu_custom_call.1} parent=1 // pred_check
      _
    $region63: #{tpu_custom_call.1} parent=1 // pred_check_branch
      %519 = sbr.rel (0) target = $region65
    $region64: #{tpu_custom_call.1} parent=1 // pred_region
      %520 = dma.done [#allocation4], 256
    $region65: #{tpu_custom_call.1} parent=1 // pred_fallthru
      _
    %521 = vsyncpa [#allocation3], 1
    %522 = vsyncpa [#allocation6], 1
    %523 = vsyncpa [#allocation9], 1
    %524 = vsyncpa [#allocation12], 1
    %525 = vsyncpa [#allocation4], 1

</llo_original>
